<compile_context>
chip_gen: v5e
topology: v5e:2x2
jax: 0.10.0
libtpu: 0.0.40
codegen_flags: <defaults>
</compile_context>

<pallas_src>
import functools

import jax
import jax.numpy as jnp
from jax.experimental import pallas as pl
from jax.experimental.pallas import tpu as pltpu


# Below this contraction size a 1x1 conv runs as a VPU broadcast-FMA chain
# instead of an MXU dot (K=4/8 against a 128/256-wide MXU is <4% utilization
# and still pays the push + result-FIFO pop latency).  Real MobileNet channel
# counts (Cin >= 16, hidden up to 960) take the MXU path.
_MXU_MIN_K = 16


def _pointwise_conv(w, x, matmul_dtype):
    """(M, K) @ (K, N) -> (M, N) f32 accumulation.

    MXU dot (optionally bf16 inputs) for real channel counts, unrolled VPU
    broadcast-FMAs (kept in f32 -- v5e's VPU has no bf16) for tiny K."""
    K = x.shape[0]
    if K >= _MXU_MIN_K:
        return jnp.dot(w.astype(matmul_dtype), x.astype(matmul_dtype),
                       preferred_element_type=jnp.float32)
    out = w[:, 0:1] * x[0:1, :]
    for c in range(1, K):
        out = out + w[:, c:c + 1] * x[c:c + 1, :]
    return out


def _inverted_residual_kernel(x_ref, w1_ref, wd_ref, w3_ref, o_ref, *,
                              H, W, matmul_dtype):
    # x_ref:  (Cin, B*H*W)  channel-major, batch+spatial packed on lanes
    # w1_ref: (hidden, Cin) pointwise expand weights (PyTorch OI layout)
    # wd_ref: (hidden, 9)   depthwise taps, k = di*3 + dj (di/dj in 0..2)
    # w3_ref: (oup, hidden) pointwise project weights (PyTorch OI layout)
    # o_ref:  (oup, B*H*W)  lane-dense output
    x = x_ref[...]
    HW = H * W
    N = x.shape[1]

    # ---- 1x1 expand conv + ReLU6 ----
    h = _pointwise_conv(w1_ref[...], x, matmul_dtype)
    h = jnp.clip(h, 0.0, 6.0)                       # (hidden, N) f32
    hidden = h.shape[0]

    # ---- per-image boundary masks for reflection-pad handling ----
    # Batch is packed on lanes, so positions are taken modulo HW (per image).
    # W and HW are powers of two here, so the modulos lower to ANDs.
    pos = jax.lax.broadcasted_iota(jnp.int32, (hidden, N), 1)
    img_pos = pos % HW                              # position within one image
    col = pos % W                                   # column within one row
    col_first = col == 0
    col_last = col == (W - 1)
    row_first = img_pos < W
    row_last = img_pos >= (H - 1) * W

    # ---- neighbour columns via lane rolls (XLU) + reflected fix-up ----
    # roll(v, s)[p] == v[p - s]; non-negative shifts only (s and N - s).
    # Rolls wrap across image boundaries only at positions that the col/row
    # masks overwrite, so lane-packing the batch is safe.
    h_m1 = pltpu.roll(h, shift=1, axis=1)           # value at p-1
    h_p1 = pltpu.roll(h, shift=N - 1, axis=1)       # value at p+1
    h_left = jnp.where(col_first, h_p1, h_m1)       # col j-1 (reflect 0 -> 1)
    h_right = jnp.where(col_last, h_m1, h_p1)       # col j+1 (reflect W-1 -> W-2)

    # ---- 3x3 depthwise conv + ReLU6 ----
    # Column-combine first, then shift the combined rows: 6 rolls + 4 selects
    # (vs 8 + 8), and only t0/t1/t2 + acc stay live -> lower vreg pressure.
    wd = wd_ref[...]                                # (hidden, 9)
    t0 = wd[:, 0:1] * h_left + wd[:, 1:2] * h + wd[:, 2:3] * h_right  # tap row 0
    t1 = wd[:, 3:4] * h_left + wd[:, 4:5] * h + wd[:, 5:6] * h_right  # tap row 1
    t2 = wd[:, 6:7] * h_left + wd[:, 7:8] * h + wd[:, 8:9] * h_right  # tap row 2
    acc = t1
    acc = acc + jnp.where(row_first,
                          pltpu.roll(t0, shift=N - W, axis=1),  # reflect -1 -> 1
                          pltpu.roll(t0, shift=W, axis=1))      # row i-1
    acc = acc + jnp.where(row_last,
                          pltpu.roll(t2, shift=W, axis=1),      # reflect H -> H-2
                          pltpu.roll(t2, shift=N - W, axis=1))  # row i+1
    acc = jnp.clip(acc, 0.0, 6.0)

    # ---- 1x1 project conv; lane-dense store ----
    out = _pointwise_conv(w3_ref[...], acc, matmul_dtype)
    o_ref[...] = out.astype(o_ref.dtype)


def inverted_residual_block(x_nchw, w1, wd, w3, *, matmul_dtype=None):
    """x_nchw: (B, Cin, H, W). w1: (hidden, Cin). wd: (hidden, 3, 3).
    w3: (oup, hidden). Returns (B, oup, H, W)."""
    B, Cin, H, W = x_nchw.shape
    hidden = w1.shape[0]
    oup = w3.shape[0]
    HW = H * W
    N = B * HW

    if matmul_dtype is None:
        # bf16 doubles MXU throughput and halves bytes at real channel counts
        # (v6e/v7x); keep the input dtype at toy sizes, where the 1x1 convs
        # run as f32 VPU FMAs anyway.
        matmul_dtype = jnp.bfloat16 if max(Cin, hidden) >= 64 else x_nchw.dtype

    # Pack the batch onto the lane axis: (B, Cin, HW) -> (Cin, B*HW).  Single
    # kernel invocation (grid=()) -> no per-step overhead, and matmul N grows
    # from HW to B*HW.  The transpose only permutes contiguous HW-sized chunks.
    x_packed = jnp.transpose(x_nchw.reshape(B, Cin, HW), (1, 0, 2)).reshape(Cin, N)
    wd_flat = wd.reshape(hidden, 9)                 # tap k = di*3 + dj

    vmem = pl.BlockSpec(memory_space=pltpu.MemorySpace.VMEM)
    out_flat = pl.pallas_call(
        functools.partial(_inverted_residual_kernel, H=H, W=W,
                          matmul_dtype=matmul_dtype),
        out_shape=jax.ShapeDtypeStruct((oup, N), x_nchw.dtype),
        in_specs=[vmem, vmem, vmem, vmem],
        out_specs=vmem,
    )(x_packed, w1, wd_flat, w3)

    # (oup, B*HW) -> (B, oup, H, W): inverse of the packing above.
    return jnp.transpose(out_flat.reshape(oup, B, HW), (1, 0, 2)).reshape(B, oup, H, W)


def _reference_forward(x_nchw, w1, wd, w3):
    """Pure-JAX (XLA conv) reference matching the PyTorch module semantics."""
    dn = ("NCHW", "OIHW", "NCHW")
    hidden = w1.shape[0]
    h = jax.lax.conv_general_dilated(
        x_nchw, w1[:, :, None, None], (1, 1), "VALID", dimension_numbers=dn)
    h = jnp.clip(h, 0.0, 6.0)
    h = jnp.pad(h, ((0, 0), (0, 0), (1, 1), (1, 1)), mode="reflect")
    h = jax.lax.conv_general_dilated(
        h, wd[:, None, :, :], (1, 1), "VALID", dimension_numbers=dn,
        feature_group_count=hidden)
    h = jnp.clip(h, 0.0, 6.0)
    out = jax.lax.conv_general_dilated(
        h, w3[:, :, None, None], (1, 1), "VALID", dimension_numbers=dn)
    return out


if __name__ == "__main__":
    # Module config: inp=4, oup=4, expand_ratio=2 -> hidden_dim=8
    B, INP, OUP, H, W = 2, 4, 4, 16, 16
    EXPAND = 2
    HIDDEN = INP * EXPAND

    key = jax.random.PRNGKey(0)
    kx, k1, k2, k3 = jax.random.split(key, 4)

    x = jax.random.normal(kx, (B, INP, H, W), dtype=jnp.float32)
    # Weights in their natural PyTorch layouts (1x1 kernel dims squeezed):
    #   conv1: (hidden, inp, 1, 1) -> (hidden, inp)
    #   dwise: (hidden, 1, 3, 3)   -> (hidden, 3, 3)
    #   conv3: (oup, hidden, 1, 1) -> (oup, hidden)
    w1 = 0.3 * jax.random.normal(k1, (HIDDEN, INP), dtype=jnp.float32)
    wd = 0.3 * jax.random.normal(k2, (HIDDEN, 3, 3), dtype=jnp.float32)
    w3 = 0.3 * jax.random.normal(k3, (OUP, HIDDEN), dtype=jnp.float32)

    out = jax.block_until_ready(inverted_residual_block(x, w1, wd, w3))

    ref = jax.block_until_ready(_reference_forward(x, w1, wd, w3))
    assert out.shape == (B, OUP, H, W), out.shape
    max_err = float(jnp.max(jnp.abs(out - ref)))
    assert jnp.allclose(out, ref, atol=1e-4, rtol=1e-4), max_err

    print("KERNEL_OK")
</pallas_src>

<mosaic_0001>
module attributes {stable_mosaic.version = 11 : i64} {
  func.func @_inverted_residual_kernel(%arg0: memref<4x512xf32, #tpu.memory_space<vmem>>, %arg1: memref<8x4xf32, #tpu.memory_space<vmem>>, %arg2: memref<8x9xf32, #tpu.memory_space<vmem>>, %arg3: memref<4x8xf32, #tpu.memory_space<vmem>>, %arg4: memref<4x512xf32, #tpu.memory_space<vmem>>) attributes {dimension_semantics = [], scalar_prefetch = 0 : i64, scratch_operands = 0 : i64, tpu.core_type = #tpu.core_type<tc>} {
    %c0 = arith.constant 0 : index
    %c0_0 = arith.constant 0 : index
    %0 = vector.load %arg0[%c0, %c0_0] : memref<4x512xf32, #tpu.memory_space<vmem>>, vector<4x512xf32>
    %c0_1 = arith.constant 0 : index
    %c0_2 = arith.constant 0 : index
    %1 = vector.load %arg1[%c0_1, %c0_2] : memref<8x4xf32, #tpu.memory_space<vmem>>, vector<8x4xf32>
    %2 = vector.extract_strided_slice %1 {offsets = [0, 0], sizes = [8, 1], strides = [1, 1]} : vector<8x4xf32> to vector<8x1xf32>
    %3 = vector.extract_strided_slice %0 {offsets = [0, 0], sizes = [1, 512], strides = [1, 1]} : vector<4x512xf32> to vector<1x512xf32>
    %4 = vector.broadcast %2 : vector<8x1xf32> to vector<8x512xf32>
    %5 = vector.broadcast %3 : vector<1x512xf32> to vector<8x512xf32>
    %6 = arith.mulf %4, %5 : vector<8x512xf32>
    %7 = vector.extract_strided_slice %1 {offsets = [0, 1], sizes = [8, 1], strides = [1, 1]} : vector<8x4xf32> to vector<8x1xf32>
    %8 = vector.extract_strided_slice %0 {offsets = [1, 0], sizes = [1, 512], strides = [1, 1]} : vector<4x512xf32> to vector<1x512xf32>
    %9 = vector.broadcast %7 : vector<8x1xf32> to vector<8x512xf32>
    %10 = vector.broadcast %8 : vector<1x512xf32> to vector<8x512xf32>
    %11 = arith.mulf %9, %10 : vector<8x512xf32>
    %12 = arith.addf %6, %11 : vector<8x512xf32>
    %13 = vector.extract_strided_slice %1 {offsets = [0, 2], sizes = [8, 1], strides = [1, 1]} : vector<8x4xf32> to vector<8x1xf32>
    %14 = vector.extract_strided_slice %0 {offsets = [2, 0], sizes = [1, 512], strides = [1, 1]} : vector<4x512xf32> to vector<1x512xf32>
    %15 = vector.broadcast %13 : vector<8x1xf32> to vector<8x512xf32>
    %16 = vector.broadcast %14 : vector<1x512xf32> to vector<8x512xf32>
    %17 = arith.mulf %15, %16 : vector<8x512xf32>
    %18 = arith.addf %12, %17 : vector<8x512xf32>
    %19 = vector.extract_strided_slice %1 {offsets = [0, 3], sizes = [8, 1], strides = [1, 1]} : vector<8x4xf32> to vector<8x1xf32>
    %20 = vector.extract_strided_slice %0 {offsets = [3, 0], sizes = [1, 512], strides = [1, 1]} : vector<4x512xf32> to vector<1x512xf32>
    %21 = vector.broadcast %19 : vector<8x1xf32> to vector<8x512xf32>
    %22 = vector.broadcast %20 : vector<1x512xf32> to vector<8x512xf32>
    %23 = arith.mulf %21, %22 : vector<8x512xf32>
    %24 = arith.addf %18, %23 : vector<8x512xf32>
    %cst = arith.constant 0.000000e+00 : f32
    %cst_3 = arith.constant 6.000000e+00 : f32
    %25 = vector.broadcast %cst : f32 to vector<8x512xf32>
    %26 = arith.maximumf %25, %24 : vector<8x512xf32>
    %27 = vector.broadcast %cst_3 : f32 to vector<8x512xf32>
    %28 = arith.minimumf %27, %26 : vector<8x512xf32>
    %29 = tpu.iota {dimensions = array<i32: 1>} : vector<8x512xi32>
    %c256_i32 = arith.constant 256 : i32
    %c0_i32 = arith.constant 0 : i32
    %30 = arith.cmpi eq, %c256_i32, %c0_i32 : i32
    %c1_i32 = arith.constant 1 : i32
    %31 = arith.select %30, %c1_i32, %c256_i32 : i32
    %32 = vector.broadcast %31 : i32 to vector<8x512xi32>
    %33 = arith.remsi %29, %32 : vector<8x512xi32>
    %c0_i32_4 = arith.constant 0 : i32
    %34 = vector.broadcast %c0_i32_4 : i32 to vector<8x512xi32>
    %35 = arith.cmpi ne, %33, %34 : vector<8x512xi32>
    %c0_i32_5 = arith.constant 0 : i32
    %36 = vector.broadcast %c0_i32_5 : i32 to vector<8x512xi32>
    %37 = arith.cmpi slt, %33, %36 : vector<8x512xi32>
    %c0_i32_6 = arith.constant 0 : i32
    %38 = arith.cmpi slt, %31, %c0_i32_6 : i32
    %39 = vector.broadcast %38 : i1 to vector<8x512xi1>
    %40 = vector.broadcast %39 : vector<8x512xi1> to vector<8x512xi1>
    %41 = arith.xori %37, %40 : vector<8x512xi1>
    %42 = arith.andi %41, %35 : vector<8x512xi1>
    %43 = vector.broadcast %31 : i32 to vector<8x512xi32>
    %44 = arith.addi %33, %43 : vector<8x512xi32>
    %45 = arith.select %42, %44, %33 : vector<8x512xi1>, vector<8x512xi32>
    %c16_i32 = arith.constant 16 : i32
    %c0_i32_7 = arith.constant 0 : i32
    %46 = arith.cmpi eq, %c16_i32, %c0_i32_7 : i32
    %c1_i32_8 = arith.constant 1 : i32
    %47 = arith.select %46, %c1_i32_8, %c16_i32 : i32
    %48 = vector.broadcast %47 : i32 to vector<8x512xi32>
    %49 = arith.remsi %29, %48 : vector<8x512xi32>
    %c0_i32_9 = arith.constant 0 : i32
    %50 = vector.broadcast %c0_i32_9 : i32 to vector<8x512xi32>
    %51 = arith.cmpi ne, %49, %50 : vector<8x512xi32>
    %c0_i32_10 = arith.constant 0 : i32
    %52 = vector.broadcast %c0_i32_10 : i32 to vector<8x512xi32>
    %53 = arith.cmpi slt, %49, %52 : vector<8x512xi32>
    %c0_i32_11 = arith.constant 0 : i32
    %54 = arith.cmpi slt, %47, %c0_i32_11 : i32
    %55 = vector.broadcast %54 : i1 to vector<8x512xi1>
    %56 = vector.broadcast %55 : vector<8x512xi1> to vector<8x512xi1>
    %57 = arith.xori %53, %56 : vector<8x512xi1>
    %58 = arith.andi %57, %51 : vector<8x512xi1>
    %59 = vector.broadcast %47 : i32 to vector<8x512xi32>
    %60 = arith.addi %49, %59 : vector<8x512xi32>
    %61 = arith.select %58, %60, %49 : vector<8x512xi1>, vector<8x512xi32>
    %c0_i32_12 = arith.constant 0 : i32
    %62 = vector.broadcast %c0_i32_12 : i32 to vector<8x512xi32>
    %63 = arith.cmpi eq, %61, %62 : vector<8x512xi32>
    %c15_i32 = arith.constant 15 : i32
    %64 = vector.broadcast %c15_i32 : i32 to vector<8x512xi32>
    %65 = arith.cmpi eq, %61, %64 : vector<8x512xi32>
    %c16_i32_13 = arith.constant 16 : i32
    %66 = vector.broadcast %c16_i32_13 : i32 to vector<8x512xi32>
    %67 = arith.cmpi slt, %45, %66 : vector<8x512xi32>
    %c240_i32 = arith.constant 240 : i32
    %68 = vector.broadcast %c240_i32 : i32 to vector<8x512xi32>
    %69 = arith.cmpi sge, %45, %68 : vector<8x512xi32>
    %c1_i32_14 = arith.constant 1 : i32
    %70 = tpu.dynamic_rotate %28 by %c1_i32_14 dim 1 : vector<8x512xf32>, i32 -> vector<8x512xf32>
    %c511_i32 = arith.constant 511 : i32
    %71 = tpu.dynamic_rotate %28 by %c511_i32 dim 1 : vector<8x512xf32>, i32 -> vector<8x512xf32>
    %72 = arith.select %63, %71, %70 : vector<8x512xi1>, vector<8x512xf32>
    %73 = arith.select %65, %70, %71 : vector<8x512xi1>, vector<8x512xf32>
    %c0_15 = arith.constant 0 : index
    %c0_16 = arith.constant 0 : index
    %74 = vector.load %arg2[%c0_15, %c0_16] : memref<8x9xf32, #tpu.memory_space<vmem>>, vector<8x9xf32>
    %75 = vector.extract_strided_slice %74 {offsets = [0, 0], sizes = [8, 1], strides = [1, 1]} : vector<8x9xf32> to vector<8x1xf32>
    %76 = vector.broadcast %75 : vector<8x1xf32> to vector<8x512xf32>
    %77 = arith.mulf %76, %72 : vector<8x512xf32>
    %78 = vector.extract_strided_slice %74 {offsets = [0, 1], sizes = [8, 1], strides = [1, 1]} : vector<8x9xf32> to vector<8x1xf32>
    %79 = vector.broadcast %78 : vector<8x1xf32> to vector<8x512xf32>
    %80 = arith.mulf %79, %28 : vector<8x512xf32>
    %81 = arith.addf %77, %80 : vector<8x512xf32>
    %82 = vector.extract_strided_slice %74 {offsets = [0, 2], sizes = [8, 1], strides = [1, 1]} : vector<8x9xf32> to vector<8x1xf32>
    %83 = vector.broadcast %82 : vector<8x1xf32> to vector<8x512xf32>
    %84 = arith.mulf %83, %73 : vector<8x512xf32>
    %85 = arith.addf %81, %84 : vector<8x512xf32>
    %86 = vector.extract_strided_slice %74 {offsets = [0, 3], sizes = [8, 1], strides = [1, 1]} : vector<8x9xf32> to vector<8x1xf32>
    %87 = vector.broadcast %86 : vector<8x1xf32> to vector<8x512xf32>
    %88 = arith.mulf %87, %72 : vector<8x512xf32>
    %89 = vector.extract_strided_slice %74 {offsets = [0, 4], sizes = [8, 1], strides = [1, 1]} : vector<8x9xf32> to vector<8x1xf32>
    %90 = vector.broadcast %89 : vector<8x1xf32> to vector<8x512xf32>
    %91 = arith.mulf %90, %28 : vector<8x512xf32>
    %92 = arith.addf %88, %91 : vector<8x512xf32>
    %93 = vector.extract_strided_slice %74 {offsets = [0, 5], sizes = [8, 1], strides = [1, 1]} : vector<8x9xf32> to vector<8x1xf32>
    %94 = vector.broadcast %93 : vector<8x1xf32> to vector<8x512xf32>
    %95 = arith.mulf %94, %73 : vector<8x512xf32>
    %96 = arith.addf %92, %95 : vector<8x512xf32>
    %97 = vector.extract_strided_slice %74 {offsets = [0, 6], sizes = [8, 1], strides = [1, 1]} : vector<8x9xf32> to vector<8x1xf32>
    %98 = vector.broadcast %97 : vector<8x1xf32> to vector<8x512xf32>
    %99 = arith.mulf %98, %72 : vector<8x512xf32>
    %100 = vector.extract_strided_slice %74 {offsets = [0, 7], sizes = [8, 1], strides = [1, 1]} : vector<8x9xf32> to vector<8x1xf32>
    %101 = vector.broadcast %100 : vector<8x1xf32> to vector<8x512xf32>
    %102 = arith.mulf %101, %28 : vector<8x512xf32>
    %103 = arith.addf %99, %102 : vector<8x512xf32>
    %104 = vector.extract_strided_slice %74 {offsets = [0, 8], sizes = [8, 1], strides = [1, 1]} : vector<8x9xf32> to vector<8x1xf32>
    %105 = vector.broadcast %104 : vector<8x1xf32> to vector<8x512xf32>
    %106 = arith.mulf %105, %73 : vector<8x512xf32>
    %107 = arith.addf %103, %106 : vector<8x512xf32>
    %c496_i32 = arith.constant 496 : i32
    %108 = tpu.dynamic_rotate %85 by %c496_i32 dim 1 : vector<8x512xf32>, i32 -> vector<8x512xf32>
    %c16_i32_17 = arith.constant 16 : i32
    %109 = tpu.dynamic_rotate %85 by %c16_i32_17 dim 1 : vector<8x512xf32>, i32 -> vector<8x512xf32>
    %110 = arith.select %67, %108, %109 : vector<8x512xi1>, vector<8x512xf32>
    %111 = arith.addf %96, %110 : vector<8x512xf32>
    %c16_i32_18 = arith.constant 16 : i32
    %112 = tpu.dynamic_rotate %107 by %c16_i32_18 dim 1 : vector<8x512xf32>, i32 -> vector<8x512xf32>
    %c496_i32_19 = arith.constant 496 : i32
    %113 = tpu.dynamic_rotate %107 by %c496_i32_19 dim 1 : vector<8x512xf32>, i32 -> vector<8x512xf32>
    %114 = arith.select %69, %112, %113 : vector<8x512xi1>, vector<8x512xf32>
    %115 = arith.addf %111, %114 : vector<8x512xf32>
    %cst_20 = arith.constant 0.000000e+00 : f32
    %cst_21 = arith.constant 6.000000e+00 : f32
    %116 = vector.broadcast %cst_20 : f32 to vector<8x512xf32>
    %117 = arith.maximumf %116, %115 : vector<8x512xf32>
    %118 = vector.broadcast %cst_21 : f32 to vector<8x512xf32>
    %119 = arith.minimumf %118, %117 : vector<8x512xf32>
    %c0_22 = arith.constant 0 : index
    %c0_23 = arith.constant 0 : index
    %120 = vector.load %arg3[%c0_22, %c0_23] : memref<4x8xf32, #tpu.memory_space<vmem>>, vector<4x8xf32>
    %121 = vector.extract_strided_slice %120 {offsets = [0, 0], sizes = [4, 1], strides = [1, 1]} : vector<4x8xf32> to vector<4x1xf32>
    %122 = vector.extract_strided_slice %119 {offsets = [0, 0], sizes = [1, 512], strides = [1, 1]} : vector<8x512xf32> to vector<1x512xf32>
    %123 = vector.broadcast %121 : vector<4x1xf32> to vector<4x512xf32>
    %124 = vector.broadcast %122 : vector<1x512xf32> to vector<4x512xf32>
    %125 = arith.mulf %123, %124 : vector<4x512xf32>
    %126 = vector.extract_strided_slice %120 {offsets = [0, 1], sizes = [4, 1], strides = [1, 1]} : vector<4x8xf32> to vector<4x1xf32>
    %127 = vector.extract_strided_slice %119 {offsets = [1, 0], sizes = [1, 512], strides = [1, 1]} : vector<8x512xf32> to vector<1x512xf32>
    %128 = vector.broadcast %126 : vector<4x1xf32> to vector<4x512xf32>
    %129 = vector.broadcast %127 : vector<1x512xf32> to vector<4x512xf32>
    %130 = arith.mulf %128, %129 : vector<4x512xf32>
    %131 = arith.addf %125, %130 : vector<4x512xf32>
    %132 = vector.extract_strided_slice %120 {offsets = [0, 2], sizes = [4, 1], strides = [1, 1]} : vector<4x8xf32> to vector<4x1xf32>
    %133 = vector.extract_strided_slice %119 {offsets = [2, 0], sizes = [1, 512], strides = [1, 1]} : vector<8x512xf32> to vector<1x512xf32>
    %134 = vector.broadcast %132 : vector<4x1xf32> to vector<4x512xf32>
    %135 = vector.broadcast %133 : vector<1x512xf32> to vector<4x512xf32>
    %136 = arith.mulf %134, %135 : vector<4x512xf32>
    %137 = arith.addf %131, %136 : vector<4x512xf32>
    %138 = vector.extract_strided_slice %120 {offsets = [0, 3], sizes = [4, 1], strides = [1, 1]} : vector<4x8xf32> to vector<4x1xf32>
    %139 = vector.extract_strided_slice %119 {offsets = [3, 0], sizes = [1, 512], strides = [1, 1]} : vector<8x512xf32> to vector<1x512xf32>
    %140 = vector.broadcast %138 : vector<4x1xf32> to vector<4x512xf32>
    %141 = vector.broadcast %139 : vector<1x512xf32> to vector<4x512xf32>
    %142 = arith.mulf %140, %141 : vector<4x512xf32>
    %143 = arith.addf %137, %142 : vector<4x512xf32>
    %144 = vector.extract_strided_slice %120 {offsets = [0, 4], sizes = [4, 1], strides = [1, 1]} : vector<4x8xf32> to vector<4x1xf32>
    %145 = vector.extract_strided_slice %119 {offsets = [4, 0], sizes = [1, 512], strides = [1, 1]} : vector<8x512xf32> to vector<1x512xf32>
    %146 = vector.broadcast %144 : vector<4x1xf32> to vector<4x512xf32>
    %147 = vector.broadcast %145 : vector<1x512xf32> to vector<4x512xf32>
    %148 = arith.mulf %146, %147 : vector<4x512xf32>
    %149 = arith.addf %143, %148 : vector<4x512xf32>
    %150 = vector.extract_strided_slice %120 {offsets = [0, 5], sizes = [4, 1], strides = [1, 1]} : vector<4x8xf32> to vector<4x1xf32>
    %151 = vector.extract_strided_slice %119 {offsets = [5, 0], sizes = [1, 512], strides = [1, 1]} : vector<8x512xf32> to vector<1x512xf32>
    %152 = vector.broadcast %150 : vector<4x1xf32> to vector<4x512xf32>
    %153 = vector.broadcast %151 : vector<1x512xf32> to vector<4x512xf32>
    %154 = arith.mulf %152, %153 : vector<4x512xf32>
    %155 = arith.addf %149, %154 : vector<4x512xf32>
    %156 = vector.extract_strided_slice %120 {offsets = [0, 6], sizes = [4, 1], strides = [1, 1]} : vector<4x8xf32> to vector<4x1xf32>
    %157 = vector.extract_strided_slice %119 {offsets = [6, 0], sizes = [1, 512], strides = [1, 1]} : vector<8x512xf32> to vector<1x512xf32>
    %158 = vector.broadcast %156 : vector<4x1xf32> to vector<4x512xf32>
    %159 = vector.broadcast %157 : vector<1x512xf32> to vector<4x512xf32>
    %160 = arith.mulf %158, %159 : vector<4x512xf32>
    %161 = arith.addf %155, %160 : vector<4x512xf32>
    %162 = vector.extract_strided_slice %120 {offsets = [0, 7], sizes = [4, 1], strides = [1, 1]} : vector<4x8xf32> to vector<4x1xf32>
    %163 = vector.extract_strided_slice %119 {offsets = [7, 0], sizes = [1, 512], strides = [1, 1]} : vector<8x512xf32> to vector<1x512xf32>
    %164 = vector.broadcast %162 : vector<4x1xf32> to vector<4x512xf32>
    %165 = vector.broadcast %163 : vector<1x512xf32> to vector<4x512xf32>
    %166 = arith.mulf %164, %165 : vector<4x512xf32>
    %167 = arith.addf %161, %166 : vector<4x512xf32>
    %c0_24 = arith.constant 0 : index
    %c0_25 = arith.constant 0 : index
    %168 = vector.load %arg4[%c0_24, %c0_25] : memref<4x512xf32, #tpu.memory_space<vmem>>, vector<4x512xf32>
    tpu.vector_store %arg4[%c0_24, %c0_25], %167 {strides = array<i32>} : memref<4x512xf32, #tpu.memory_space<vmem>>, vector<4x512xf32>,
    return
  }
}

</mosaic_0001>

<llo_original>
// kernel: tpu_custom_call.1
$region0: #{tpu_custom_call.1}
  #allocation0 [shape = 'u32[]', space=smem, size = 0x4, offset = 0x4, fixed_abs, tag = 'smem constant byte address 0x4 - core index']
  #allocation1 [shape = 'u32[72,128]{1,0:T(1,128)}', space=vmem, size = 0x9000, scoped, tag = 'internal scratch']
  %s0 = inlined_call_operand.hbm [shape: f32[4,512], index: 0, kind: input, shape index: {}]
  %s1 = inlined_call_operand.vmem [shape: f32[8,4], index: 1, kind: input, shape index: {}]
  %s2 = inlined_call_operand.vmem [shape: f32[8,9], index: 2, kind: input, shape index: {}]
  %s3 = inlined_call_operand.vmem [shape: f32[4,8], index: 3, kind: input, shape index: {}]
  %s4 = inlined_call_operand.hbm [shape: f32[4,512], index: 4, kind: output, shape index: {}]
  %s5 = sld [smem:[#allocation0]]
  $region30: #{tpu_custom_call.1} parent=0
    _
  %s7 = ssub.s32 1, %s5
  %s8 = scalar_select 0, %s7, %s5
  $region1: #{tpu_custom_call.1} parent=0
    #allocation2 [shape = 'u8[8192]{0}', space=vmem, size = 0x2000, scoped, tag = 'input window, operand 0, single buffered']
    #allocation3 [shape = 's32[1]{0}', space=sflag, size = 0x4, scoped, tag = 'scoped memory for tpu_custom_call.1']
    #allocation4 [shape = 's32[1]{0}', space=sflag, size = 0x4, scoped, tag = 'scoped memory for tpu_custom_call.1']
    #allocation5 [shape = 'u8[8192]{0}', space=vmem, size = 0x2000, scoped, tag = 'output window, operand 0, single buffered']
    %9 = vsyncpa [#allocation3], 0
    %10 = vsyncpa [#allocation4], 0
    // Predicated region
    $region2: #{tpu_custom_call.1} parent=1 // pred_check
      _
    $region3: #{tpu_custom_call.1} parent=1 // pred_check_branch
      %12 = sbr.rel (0) target = $region5
    $region4: #{tpu_custom_call.1} parent=1 // pred_region
      %14 = vsyncadd [#allocation3], 0
      %s16 = sshll.u32 %s0, 4
      %s17 = int_to_ptr.hbm [resolvable:$true] %s16
      %s18 = sshll.u32 [#allocation2], 4
      %s19 = int_to_ptr.vmem [resolvable:$true] %s18
      %21 = dma.hbm_to_vmem [thread:$0]  %s17, 256, %s19, [#allocation3]
    $region5: #{tpu_custom_call.1} parent=1 // pred_fallthru
      _
    // Predicated region
    $region6: #{tpu_custom_call.1} parent=1 // pred_check
      _
    $region7: #{tpu_custom_call.1} parent=1 // pred_check_branch
      %23 = sbr.rel (0) target = $region9
    $region8: #{tpu_custom_call.1} parent=1 // pred_region
      _
    $region9: #{tpu_custom_call.1} parent=1 // pred_fallthru
      _
    // Predicated region
    $region10: #{tpu_custom_call.1} parent=1 // pred_check
      _
    $region11: #{tpu_custom_call.1} parent=1 // pred_check_branch
      %25 = sbr.rel (0) target = $region13
    $region12: #{tpu_custom_call.1} parent=1 // pred_region
      _
    $region13: #{tpu_custom_call.1} parent=1 // pred_fallthru
      _
    // Predicated region
    $region14: #{tpu_custom_call.1} parent=1 // pred_check
      _
    $region15: #{tpu_custom_call.1} parent=1 // pred_check_branch
      %27 = sbr.rel (0) target = $region17
    $region16: #{tpu_custom_call.1} parent=1 // pred_region
      _
    $region17: #{tpu_custom_call.1} parent=1 // pred_fallthru
      _
    // Predicated region
    $region18: #{tpu_custom_call.1} parent=1 // pred_check
      _
    $region19: #{tpu_custom_call.1} parent=1 // pred_check_branch
      %29 = sbr.rel (0) target = $region21
    $region20: #{tpu_custom_call.1} parent=1 // pred_region
      %31 = dma.done [#allocation3], 256
    $region21: #{tpu_custom_call.1} parent=1 // pred_fallthru
      _
    %v32 = vld [vmem:[#allocation2] sm:$0xff]
    %v33 = vld [vmem:[#allocation2 + $0x8] sm:$0xff]
    %v34 = vld [vmem:[%s1] sm:$0xff]
    %36 = vset.pattern.permute.xlu0 0
    %37 = vperm.xlu0 %36, %v34
    %v38 = vpop.permute.xlu0 %37
    %v42 = vperm.slane %v32, 0
    %v43 = vperm.slane %v32, 4
    %v44 = vperm.slane %v33, 0
    %v45 = vperm.slane %v33, 4
    %v50 = vperm.slane %v42, 0
    %v51 = vperm.slane %v43, 0
    %v52 = vperm.slane %v44, 0
    %v53 = vperm.slane %v45, 0
    %v54 = vmul.f32 %v38, %v50
    %v55 = vmul.f32 %v38, %v51
    %v56 = vmul.f32 %v38, %v52
    %v57 = vmul.f32 %v38, %v53
    %58 = vset.pattern.permute.xlu0 1
    %59 = vperm.xlu0 %58, %v34
    %v60 = vpop.permute.xlu0 %59
    %v62 = vperm.slane %v32, 1
    %v63 = vperm.slane %v32, 5
    %v64 = vperm.slane %v33, 1
    %v65 = vperm.slane %v33, 5
    %v70 = vperm.slane %v62, 1
    %v71 = vperm.slane %v63, 1
    %v72 = vperm.slane %v64, 1
    %v73 = vperm.slane %v65, 1
    %v74 = vmul.f32 %v60, %v70
    %v75 = vmul.f32 %v60, %v71
    %v76 = vmul.f32 %v60, %v72
    %v77 = vmul.f32 %v60, %v73
    %v78 = vadd.f32 %v54, %v74
    %v79 = vadd.f32 %v55, %v75
    %v80 = vadd.f32 %v56, %v76
    %v81 = vadd.f32 %v57, %v77
    %82 = vset.pattern.permute.xlu0 2
    %83 = vperm.xlu0 %82, %v34
    %v84 = vpop.permute.xlu0 %83
    %v86 = vperm.slane %v32, 2
    %v87 = vperm.slane %v32, 6
    %v88 = vperm.slane %v33, 2
    %v89 = vperm.slane %v33, 6
    %v94 = vperm.slane %v86, 2
    %v95 = vperm.slane %v87, 2
    %v96 = vperm.slane %v88, 2
    %v97 = vperm.slane %v89, 2
    %v98 = vmul.f32 %v84, %v94
    %v99 = vmul.f32 %v84, %v95
    %v100 = vmul.f32 %v84, %v96
    %v101 = vmul.f32 %v84, %v97
    %v102 = vadd.f32 %v78, %v98
    %v103 = vadd.f32 %v79, %v99
    %v104 = vadd.f32 %v80, %v100
    %v105 = vadd.f32 %v81, %v101
    %106 = vset.pattern.permute.xlu0 3
    %107 = vperm.xlu0 %106, %v34
    %v108 = vpop.permute.xlu0 %107
    %v110 = vperm.slane %v32, 3
    %v111 = vperm.slane %v32, 7
    %v112 = vperm.slane %v33, 3
    %v113 = vperm.slane %v33, 7
    %v118 = vperm.slane %v110, 3
    %v119 = vperm.slane %v111, 3
    %v120 = vperm.slane %v112, 3
    %v121 = vperm.slane %v113, 3
    %v122 = vmul.f32 %v108, %v118
    %v123 = vmul.f32 %v108, %v119
    %v124 = vmul.f32 %v108, %v120
    %v125 = vmul.f32 %v108, %v121
    %v126 = vadd.f32 %v102, %v122
    %v127 = vadd.f32 %v103, %v123
    %v128 = vadd.f32 %v104, %v124
    %v129 = vadd.f32 %v105, %v125
    %v130 = vmax.f32 %v126, 0.0
    %v131 = vmax.f32 %v127, 0.0
    %v132 = vmax.f32 %v128, 0.0
    %v133 = vmax.f32 %v129, 0.0
    %v134 = vmin.f32 %v130, 6.0
    %v135 = vmin.f32 %v131, 6.0
    %v136 = vmin.f32 %v132, 6.0
    %v137 = vmin.f32 %v133, 6.0
    %v138 = vlaneseq
    %v139 = vand.u32 %v138, 127
    %v140 = vadd.s32 %v139, 128
    %v141 = vadd.s32 %v139, 256
    %v142 = vadd.s32 %v139, 384
    %vm143 = vcmp.lt.s32.totalorder %v139, 0
    %v144 = vsub.s32 0, %v139
    %v145 = vsel %vm143, %v144, %v139
    %v146 = vshrl.u32 %v145, 8
    %v147 = vand.u32 %v145, 255
    %v148 = vsub.s32 0, %v147
    %v149 = vsel %vm143, %v148, %v147
    %vm150 = vcmp.lt.s32.totalorder %v140, 0
    %v151 = vsub.s32 0, %v140
    %v152 = vsel %vm150, %v151, %v140
    %v153 = vshrl.u32 %v152, 8
    %v154 = vand.u32 %v152, 255
    %v155 = vsub.s32 0, %v154
    %v156 = vsel %vm150, %v155, %v154
    %vm157 = vcmp.lt.s32.totalorder %v141, 0
    %v158 = vsub.s32 0, %v141
    %v159 = vsel %vm157, %v158, %v141
    %v160 = vshrl.u32 %v159, 8
    %v161 = vand.u32 %v159, 255
    %v162 = vsub.s32 0, %v161
    %v163 = vsel %vm157, %v162, %v161
    %vm164 = vcmp.lt.s32.totalorder %v142, 0
    %v165 = vsub.s32 0, %v142
    %v166 = vsel %vm164, %v165, %v142
    %v167 = vshrl.u32 %v166, 8
    %v168 = vand.u32 %v166, 255
    %v169 = vsub.s32 0, %v168
    %v170 = vsel %vm164, %v169, %v168
    %vm171 = vcmp.ne.s32.totalorder %v149, 0
    %vm172 = vcmp.ne.s32.totalorder %v156, 0
    %vm173 = vcmp.ne.s32.totalorder %v163, 0
    %vm174 = vcmp.ne.s32.totalorder %v170, 0
    %vm175 = vcmp.lt.s32.totalorder %v149, 0
    %vm176 = vcmp.lt.s32.totalorder %v156, 0
    %vm177 = vcmp.lt.s32.totalorder %v163, 0
    %vm178 = vcmp.lt.s32.totalorder %v170, 0
    %vm179 = vmand %vm175, %vm171
    %vm180 = vmand %vm176, %vm172
    %vm181 = vmand %vm177, %vm173
    %vm182 = vmand %vm178, %vm174
    %v183 = vadd.s32 %v149, 256
    %v184 = vadd.s32 %v156, 256
    %v185 = vadd.s32 %v163, 256
    %v186 = vadd.s32 %v170, 256
    %v187 = vsel %vm179, %v183, %v149
    %v188 = vsel %vm180, %v184, %v156
    %v189 = vsel %vm181, %v185, %v163
    %v190 = vsel %vm182, %v186, %v170
    %vm191 = vcmp.lt.s32.totalorder %v139, 0
    %v192 = vsub.s32 0, %v139
    %v193 = vsel %vm191, %v192, %v139
    %v194 = vshrl.u32 %v193, 4
    %v195 = vand.u32 %v193, 15
    %v196 = vsub.s32 0, %v195
    %v197 = vsel %vm191, %v196, %v195
    %vm198 = vcmp.lt.s32.totalorder %v140, 0
    %v199 = vsub.s32 0, %v140
    %v200 = vsel %vm198, %v199, %v140
    %v201 = vshrl.u32 %v200, 4
    %v202 = vand.u32 %v200, 15
    %v203 = vsub.s32 0, %v202
    %v204 = vsel %vm198, %v203, %v202
    %vm205 = vcmp.lt.s32.totalorder %v141, 0
    %v206 = vsub.s32 0, %v141
    %v207 = vsel %vm205, %v206, %v141
    %v208 = vshrl.u32 %v207, 4
    %v209 = vand.u32 %v207, 15
    %v210 = vsub.s32 0, %v209
    %v211 = vsel %vm205, %v210, %v209
    %vm212 = vcmp.lt.s32.totalorder %v142, 0
    %v213 = vsub.s32 0, %v142
    %v214 = vsel %vm212, %v213, %v142
    %v215 = vshrl.u32 %v214, 4
    %v216 = vand.u32 %v214, 15
    %v217 = vsub.s32 0, %v216
    %v218 = vsel %vm212, %v217, %v216
    %vm219 = vcmp.ne.s32.totalorder %v197, 0
    %vm220 = vcmp.ne.s32.totalorder %v204, 0
    %vm221 = vcmp.ne.s32.totalorder %v211, 0
    %vm222 = vcmp.ne.s32.totalorder %v218, 0
    %vm223 = vcmp.lt.s32.totalorder %v197, 0
    %vm224 = vcmp.lt.s32.totalorder %v204, 0
    %vm225 = vcmp.lt.s32.totalorder %v211, 0
    %vm226 = vcmp.lt.s32.totalorder %v218, 0
    %vm227 = vmand %vm223, %vm219
    %vm228 = vmand %vm224, %vm220
    %vm229 = vmand %vm225, %vm221
    %vm230 = vmand %vm226, %vm222
    %v231 = vadd.s32 %v197, 16
    %v232 = vadd.s32 %v204, 16
    %v233 = vadd.s32 %v211, 16
    %v234 = vadd.s32 %v218, 16
    %v235 = vsel %vm227, %v231, %v197
    %v236 = vsel %vm228, %v232, %v204
    %v237 = vsel %vm229, %v233, %v211
    %v238 = vsel %vm230, %v234, %v218
    %vm239 = vcmp.eq.s32.totalorder %v235, 0
    %vm240 = vcmp.eq.s32.totalorder %v236, 0
    %vm241 = vcmp.eq.s32.totalorder %v237, 0
    %vm242 = vcmp.eq.s32.totalorder %v238, 0
    %vm243 = vcmp.eq.s32.totalorder %v235, 15
    %vm244 = vcmp.eq.s32.totalorder %v236, 15
    %vm245 = vcmp.eq.s32.totalorder %v237, 15
    %vm246 = vcmp.eq.s32.totalorder %v238, 15
    %vm247 = vcmp.lt.s32.totalorder %v187, 16
    %vm248 = vcmp.lt.s32.totalorder %v188, 16
    %vm249 = vcmp.lt.s32.totalorder %v189, 16
    %vm250 = vcmp.lt.s32.totalorder %v190, 16
    %vm251 = vcmp.ge.s32.totalorder %v187, 240
    %vm252 = vcmp.ge.s32.totalorder %v188, 240
    %vm253 = vcmp.ge.s32.totalorder %v189, 240
    %vm254 = vcmp.ge.s32.totalorder %v190, 240
    %255 = vrot.lane.b32.xlu0 %v134, 1
    %v256 = vpop.permute.xlu0 %255
    %257 = vrot.lane.b32.xlu0 %v135, 1
    %v258 = vpop.permute.xlu0 %257
    %259 = vrot.lane.b32.xlu0 %v136, 1
    %v260 = vpop.permute.xlu0 %259
    %261 = vrot.lane.b32.xlu0 %v137, 1
    %v262 = vpop.permute.xlu0 %261
    %vm263 = vcmp.lt.s32.totalorder %v139, 1
    %v264 = vsel %vm263, %v260, %v262
    %v265 = vsel %vm263, %v258, %v260
    %v266 = vsel %vm263, %v256, %v258
    %v267 = vsel %vm263, %v262, %v256
    %268 = vrot.lane.b32.xlu0 %v134, 127
    %v269 = vpop.permute.xlu0 %268
    %270 = vrot.lane.b32.xlu0 %v135, 127
    %v271 = vpop.permute.xlu0 %270
    %272 = vrot.lane.b32.xlu0 %v136, 127
    %v273 = vpop.permute.xlu0 %272
    %274 = vrot.lane.b32.xlu0 %v137, 127
    %v275 = vpop.permute.xlu0 %274
    %vm276 = vcmp.lt.s32.totalorder %v139, 127
    %v277 = vsel %vm276, %v273, %v275
    %v278 = vsel %vm276, %v271, %v273
    %v279 = vsel %vm276, %v269, %v271
    %v280 = vsel %vm276, %v275, %v269
    %v281 = vsel %vm239, %v279, %v267
    %v282 = vsel %vm240, %v278, %v266
    %v283 = vsel %vm241, %v277, %v265
    %v284 = vsel %vm242, %v280, %v264
    %v285 = vsel %vm243, %v267, %v279
    %v286 = vsel %vm244, %v266, %v278
    %v287 = vsel %vm245, %v265, %v277
    %v288 = vsel %vm246, %v264, %v280
    %v289 = vld [vmem:[%s2] sm:$0xff]
    %291 = vset.pattern.permute.xlu0 0
    %292 = vperm.xlu0 %291, %v289
    %v293 = vpop.permute.xlu0 %292
    %v295 = vmul.f32 %v293, %v281
    %v296 = vmul.f32 %v293, %v282
    %v297 = vmul.f32 %v293, %v283
    %v298 = vmul.f32 %v293, %v284
    %299 = vset.pattern.permute.xlu0 1
    %300 = vperm.xlu0 %299, %v289
    %v301 = vpop.permute.xlu0 %300
    %v303 = vmul.f32 %v301, %v134
    %v304 = vmul.f32 %v301, %v135
    %v305 = vmul.f32 %v301, %v136
    %v306 = vmul.f32 %v301, %v137
    %v307 = vadd.f32 %v295, %v303
    %v308 = vadd.f32 %v296, %v304
    %v309 = vadd.f32 %v297, %v305
    %v310 = vadd.f32 %v298, %v306
    %311 = vset.pattern.permute.xlu0 2
    %312 = vperm.xlu0 %311, %v289
    %v313 = vpop.permute.xlu0 %312
    %v315 = vmul.f32 %v313, %v285
    %v316 = vmul.f32 %v313, %v286
    %v317 = vmul.f32 %v313, %v287
    %v318 = vmul.f32 %v313, %v288
    %v319 = vadd.f32 %v307, %v315
    %v320 = vadd.f32 %v308, %v316
    %v321 = vadd.f32 %v309, %v317
    %v322 = vadd.f32 %v310, %v318
    %323 = vset.pattern.permute.xlu0 3
    %324 = vperm.xlu0 %323, %v289
    %v325 = vpop.permute.xlu0 %324
    %v327 = vmul.f32 %v325, %v281
    %v328 = vmul.f32 %v325, %v282
    %v329 = vmul.f32 %v325, %v283
    %v330 = vmul.f32 %v325, %v284
    %331 = vset.pattern.permute.xlu0 4
    %332 = vperm.xlu0 %331, %v289
    %v333 = vpop.permute.xlu0 %332
    %v335 = vmul.f32 %v333, %v134
    %v336 = vmul.f32 %v333, %v135
    %v337 = vmul.f32 %v333, %v136
    %v338 = vmul.f32 %v333, %v137
    %v339 = vadd.f32 %v327, %v335
    %v340 = vadd.f32 %v328, %v336
    %v341 = vadd.f32 %v329, %v337
    %v342 = vadd.f32 %v330, %v338
    %343 = vset.pattern.permute.xlu0 5
    %344 = vperm.xlu0 %343, %v289
    %v345 = vpop.permute.xlu0 %344
    %v347 = vmul.f32 %v345, %v285
    %v348 = vmul.f32 %v345, %v286
    %v349 = vmul.f32 %v345, %v287
    %v350 = vmul.f32 %v345, %v288
    %v351 = vadd.f32 %v339, %v347
    %v352 = vadd.f32 %v340, %v348
    %v353 = vadd.f32 %v341, %v349
    %v354 = vadd.f32 %v342, %v350
    %355 = vset.pattern.permute.xlu0 6
    %356 = vperm.xlu0 %355, %v289
    %v357 = vpop.permute.xlu0 %356
    %v359 = vmul.f32 %v357, %v281
    %v360 = vmul.f32 %v357, %v282
    %v361 = vmul.f32 %v357, %v283
    %v362 = vmul.f32 %v357, %v284
    %363 = vset.pattern.permute.xlu0 7
    %364 = vperm.xlu0 %363, %v289
    %v365 = vpop.permute.xlu0 %364
    %v367 = vmul.f32 %v365, %v134
    %v368 = vmul.f32 %v365, %v135
    %v369 = vmul.f32 %v365, %v136
    %v370 = vmul.f32 %v365, %v137
    %v371 = vadd.f32 %v359, %v367
    %v372 = vadd.f32 %v360, %v368
    %v373 = vadd.f32 %v361, %v369
    %v374 = vadd.f32 %v362, %v370
    %375 = vset.pattern.permute.xlu0 8
    %376 = vperm.xlu0 %375, %v289
    %v377 = vpop.permute.xlu0 %376
    %v379 = vmul.f32 %v377, %v285
    %v380 = vmul.f32 %v377, %v286
    %v381 = vmul.f32 %v377, %v287
    %v382 = vmul.f32 %v377, %v288
    %v383 = vadd.f32 %v371, %v379
    %v384 = vadd.f32 %v372, %v380
    %v385 = vadd.f32 %v373, %v381
    %v386 = vadd.f32 %v374, %v382
    %387 = vrot.lane.b32.xlu0 %v319, 112
    %v388 = vpop.permute.xlu0 %387
    %389 = vrot.lane.b32.xlu0 %v320, 112
    %v390 = vpop.permute.xlu0 %389
    %391 = vrot.lane.b32.xlu0 %v321, 112
    %v392 = vpop.permute.xlu0 %391
    %393 = vrot.lane.b32.xlu0 %v322, 112
    %v394 = vpop.permute.xlu0 %393
    %vm395 = vcmp.lt.s32.totalorder %v139, 112
    %v396 = vsel %vm395, %v392, %v394
    %v397 = vsel %vm395, %v390, %v392
    %v398 = vsel %vm395, %v388, %v390
    %v399 = vsel %vm395, %v394, %v388
    %400 = vrot.lane.b32.xlu0 %v319, 16
    %v401 = vpop.permute.xlu0 %400
    %402 = vrot.lane.b32.xlu0 %v320, 16
    %v403 = vpop.permute.xlu0 %402
    %404 = vrot.lane.b32.xlu0 %v321, 16
    %v405 = vpop.permute.xlu0 %404
    %406 = vrot.lane.b32.xlu0 %v322, 16
    %v407 = vpop.permute.xlu0 %406
    %vm408 = vcmp.lt.s32.totalorder %v139, 16
    %v409 = vsel %vm408, %v405, %v407
    %v410 = vsel %vm408, %v403, %v405
    %v411 = vsel %vm408, %v401, %v403
    %v412 = vsel %vm408, %v407, %v401
    %v413 = vsel %vm247, %v398, %v412
    %v414 = vsel %vm248, %v397, %v411
    %v415 = vsel %vm249, %v396, %v410
    %v416 = vsel %vm250, %v399, %v409
    %v417 = vadd.f32 %v351, %v413
    %v418 = vadd.f32 %v352, %v414
    %v419 = vadd.f32 %v353, %v415
    %v420 = vadd.f32 %v354, %v416
    %421 = vrot.lane.b32.xlu0 %v383, 16
    %v422 = vpop.permute.xlu0 %421
    %423 = vrot.lane.b32.xlu0 %v384, 16
    %v424 = vpop.permute.xlu0 %423
    %425 = vrot.lane.b32.xlu0 %v385, 16
    %v426 = vpop.permute.xlu0 %425
    %427 = vrot.lane.b32.xlu0 %v386, 16
    %v428 = vpop.permute.xlu0 %427
    %v429 = vsel %vm408, %v426, %v428
    %v430 = vsel %vm408, %v424, %v426
    %v431 = vsel %vm408, %v422, %v424
    %v432 = vsel %vm408, %v428, %v422
    %433 = vrot.lane.b32.xlu0 %v383, 112
    %v434 = vpop.permute.xlu0 %433
    %435 = vrot.lane.b32.xlu0 %v384, 112
    %v436 = vpop.permute.xlu0 %435
    %437 = vrot.lane.b32.xlu0 %v385, 112
    %v438 = vpop.permute.xlu0 %437
    %439 = vrot.lane.b32.xlu0 %v386, 112
    %v440 = vpop.permute.xlu0 %439
    %v441 = vsel %vm395, %v438, %v440
    %v442 = vsel %vm395, %v436, %v438
    %v443 = vsel %vm395, %v434, %v436
    %v444 = vsel %vm395, %v440, %v434
    %v445 = vsel %vm251, %v432, %v443
    %v446 = vsel %vm252, %v431, %v442
    %v447 = vsel %vm253, %v430, %v441
    %v448 = vsel %vm254, %v429, %v444
    %v449 = vadd.f32 %v417, %v445
    %v450 = vadd.f32 %v418, %v446
    %v451 = vadd.f32 %v419, %v447
    %v452 = vadd.f32 %v420, %v448
    %v453 = vmax.f32 %v449, 0.0
    %v454 = vmax.f32 %v450, 0.0
    %v455 = vmax.f32 %v451, 0.0
    %v456 = vmax.f32 %v452, 0.0
    %v457 = vmin.f32 %v453, 6.0
    %v458 = vmin.f32 %v454, 6.0
    %v459 = vmin.f32 %v455, 6.0
    %v460 = vmin.f32 %v456, 6.0
    %v461 = vld [vmem:[%s3] sm:$0xf]
    %463 = vset.pattern.permute.xlu0 0
    %464 = vperm.xlu0 %463, %v461
    %v465 = vpop.permute.xlu0 %464
    %v467 = vperm.slane %v457, 0
    %v468 = vperm.slane %v458, 0
    %v469 = vperm.slane %v459, 0
    %v470 = vperm.slane %v460, 0
    %v471 = vmul.f32 %v465, %v467
    %v472 = vmul.f32 %v465, %v468
    %v473 = vmul.f32 %v465, %v469
    %v474 = vmul.f32 %v465, %v470
    %475 = vset.pattern.permute.xlu0 1
    %476 = vperm.xlu0 %475, %v461
    %v477 = vpop.permute.xlu0 %476
    %v479 = vperm.slane %v457, 1
    %v480 = vperm.slane %v458, 1
    %v481 = vperm.slane %v459, 1
    %v482 = vperm.slane %v460, 1
    %v483 = vmul.f32 %v477, %v479
    %v484 = vmul.f32 %v477, %v480
    %v485 = vmul.f32 %v477, %v481
    %v486 = vmul.f32 %v477, %v482
    %v487 = vadd.f32 %v471, %v483
    %v488 = vadd.f32 %v472, %v484
    %v489 = vadd.f32 %v473, %v485
    %v490 = vadd.f32 %v474, %v486
    %491 = vset.pattern.permute.xlu0 2
    %492 = vperm.xlu0 %491, %v461
    %v493 = vpop.permute.xlu0 %492
    %v495 = vperm.slane %v457, 2
    %v496 = vperm.slane %v458, 2
    %v497 = vperm.slane %v459, 2
    %v498 = vperm.slane %v460, 2
    %v499 = vmul.f32 %v493, %v495
    %v500 = vmul.f32 %v493, %v496
    %v501 = vmul.f32 %v493, %v497
    %v502 = vmul.f32 %v493, %v498
    %v503 = vadd.f32 %v487, %v499
    %v504 = vadd.f32 %v488, %v500
    %v505 = vadd.f32 %v489, %v501
    %v506 = vadd.f32 %v490, %v502
    %507 = vset.pattern.permute.xlu0 3
    %508 = vperm.xlu0 %507, %v461
    %v509 = vpop.permute.xlu0 %508
    %v511 = vperm.slane %v457, 3
    %v512 = vperm.slane %v458, 3
    %v513 = vperm.slane %v459, 3
    %v514 = vperm.slane %v460, 3
    %v515 = vmul.f32 %v509, %v511
    %v516 = vmul.f32 %v509, %v512
    %v517 = vmul.f32 %v509, %v513
    %v518 = vmul.f32 %v509, %v514
    %v519 = vadd.f32 %v503, %v515
    %v520 = vadd.f32 %v504, %v516
    %v521 = vadd.f32 %v505, %v517
    %v522 = vadd.f32 %v506, %v518
    %523 = vset.pattern.permute.xlu0 4
    %524 = vperm.xlu0 %523, %v461
    %v525 = vpop.permute.xlu0 %524
    %v527 = vperm.slane %v457, 4
    %v528 = vperm.slane %v458, 4
    %v529 = vperm.slane %v459, 4
    %v530 = vperm.slane %v460, 4
    %v531 = vmul.f32 %v525, %v527
    %v532 = vmul.f32 %v525, %v528
    %v533 = vmul.f32 %v525, %v529
    %v534 = vmul.f32 %v525, %v530
    %v535 = vadd.f32 %v519, %v531
    %v536 = vadd.f32 %v520, %v532
    %v537 = vadd.f32 %v521, %v533
    %v538 = vadd.f32 %v522, %v534
    %539 = vset.pattern.permute.xlu0 5
    %540 = vperm.xlu0 %539, %v461
    %v541 = vpop.permute.xlu0 %540
    %v543 = vperm.slane %v457, 5
    %v544 = vperm.slane %v458, 5
    %v545 = vperm.slane %v459, 5
    %v546 = vperm.slane %v460, 5
    %v547 = vmul.f32 %v541, %v543
    %v548 = vmul.f32 %v541, %v544
    %v549 = vmul.f32 %v541, %v545
    %v550 = vmul.f32 %v541, %v546
    %v551 = vadd.f32 %v535, %v547
    %v552 = vadd.f32 %v536, %v548
    %v553 = vadd.f32 %v537, %v549
    %v554 = vadd.f32 %v538, %v550
    %555 = vset.pattern.permute.xlu0 6
    %556 = vperm.xlu0 %555, %v461
    %v557 = vpop.permute.xlu0 %556
    %v559 = vperm.slane %v457, 6
    %v560 = vperm.slane %v458, 6
    %v561 = vperm.slane %v459, 6
    %v562 = vperm.slane %v460, 6
    %v563 = vmul.f32 %v557, %v559
    %v564 = vmul.f32 %v557, %v560
    %v565 = vmul.f32 %v557, %v561
    %v566 = vmul.f32 %v557, %v562
    %v567 = vadd.f32 %v551, %v563
    %v568 = vadd.f32 %v552, %v564
    %v569 = vadd.f32 %v553, %v565
    %v570 = vadd.f32 %v554, %v566
    %571 = vset.pattern.permute.xlu0 7
    %572 = vperm.xlu0 %571, %v461
    %v573 = vpop.permute.xlu0 %572
    %v575 = vperm.slane %v457, 7
    %v576 = vperm.slane %v458, 7
    %v577 = vperm.slane %v459, 7
    %v578 = vperm.slane %v460, 7
    %v579 = vmul.f32 %v573, %v575
    %v580 = vmul.f32 %v573, %v576
    %v581 = vmul.f32 %v573, %v577
    %v582 = vmul.f32 %v573, %v578
    %v583 = vadd.f32 %v567, %v579
    %v584 = vadd.f32 %v568, %v580
    %v585 = vadd.f32 %v569, %v581
    %v586 = vadd.f32 %v570, %v582
    %v591 = vrot.slane %v584, 4
    %v592 = vrot.slane %v586, 4
    %vm593 = vcmask 1043456
    %v594 = vsel %vm593, %v583, %v591
    %v595 = vsel %vm593, %v585, %v592
    %598 = vst [vmem:[#allocation5] sm:$0xff] %v594
    %599 = vst [vmem:[#allocation5 + $0x8] sm:$0xff] %v595
    // Predicated region
    $region22: #{tpu_custom_call.1} parent=1 // pred_check
      _
    $region23: #{tpu_custom_call.1} parent=1 // pred_check_branch
      %601 = sbr.rel (0) target = $region25
    $region24: #{tpu_custom_call.1} parent=1 // pred_region
      %603 = vsyncadd [#allocation4], 0
      %s605 = sshll.u32 [#allocation5], 4
      %s606 = int_to_ptr.vmem [resolvable:$true] %s605
      %s607 = sshll.u32 %s4, 4
      %s608 = int_to_ptr.hbm [resolvable:$true] %s607
      %610 = dma.vmem_to_hbm [thread:$0]  %s606, 256, %s608, [#allocation4]
    $region25: #{tpu_custom_call.1} parent=1 // pred_fallthru
      _
    // Predicated region
    $region26: #{tpu_custom_call.1} parent=1 // pred_check
      _
    $region27: #{tpu_custom_call.1} parent=1 // pred_check_branch
      %612 = sbr.rel (0) target = $region29
    $region28: #{tpu_custom_call.1} parent=1 // pred_region
      %614 = dma.done [#allocation4], 256
    $region29: #{tpu_custom_call.1} parent=1 // pred_fallthru
      _
    %615 = vsyncpa [#allocation3], 1
    %616 = vsyncpa [#allocation4], 1

</llo_original>
